<compile_context>
chip_gen: v6e
topology: v6e:2x2x1
jax: 0.10.0
libtpu: 0.0.40
codegen_flags: <defaults>
</compile_context>

<pallas_src>
import functools

import numpy as np
import jax
import jax.numpy as jnp
from jax.experimental import pallas as pl
from jax.experimental.pallas import tpu as pltpu


def _fused_minmpjpe_kernel(mean_ref, sigma_ref, t_ref, z_ref, o_ref, acc_ref,
                           *, inv_j):
    # Init running-min accumulator (VMEM scratch) on the first grid step.
    @pl.when(pl.program_id(0) == 0)
    def _():
        acc_ref[...] = jnp.full(acc_ref.shape, jnp.inf, dtype=acc_ref.dtype)

    # Fused sampling: x[s, k] = mean[0, k] + z[s, k] * sigma[0, k]   -> (ts, K)
    x = mean_ref[...] + z_ref[...] * sigma_ref[...]
    d = t_ref[...] - x                                   # (ts, K), 2-D (B == 1)
    per = jnp.sum(d * d, axis=-1, keepdims=True)         # (ts, 1)  sum over J*3
    acc_ref[...] = jnp.minimum(acc_ref[...],
                               jnp.min(per, axis=0, keepdims=True))

    # Write the output exactly once, scaling by 1/J in the epilogue.
    # (inv_j > 0, so the scale commutes with the running min.)
    @pl.when(pl.program_id(0) == pl.num_programs(0) - 1)
    def _():
        o_ref[...] = acc_ref[...] * inv_j


def _vmem_budget_bytes():
    # Generation-aware budget for the double-buffered z tiles:
    # v7x has 64 MiB physical VMEM (32 MiB scoped default); v5e/v6e have
    # 128 MiB (16 / 32 MiB scoped default).  Stay well inside every default.
    try:
        phys = int(pltpu.get_tpu_info().vmem_capacity_bytes)
    except Exception:
        phys = 64 * 1024 * 1024
    return min(phys // 8, 8 * 1024 * 1024)


def _pick_sample_tile(s, k):
    """Largest legal sample-tile: whole axis if it fits the VMEM budget,
    else the biggest multiple-of-8 divisor of S that fits."""
    budget = _vmem_budget_bytes()
    bytes_per_row = 2 * k * 4          # double-buffered f32 z rows
    if s * bytes_per_row <= budget:
        return s                       # single grid step (shipped S=200 case)
    max_rows = max(8, (budget // bytes_per_row) // 8 * 8)
    for ts in range(min(max_rows, (s // 8) * 8), 0, -8):
        if s % ts == 0:
            return ts
    return s  # no multiple-of-8 divisor fits; full axis is still a legal block


def iso_gaussian_forward(mean, target, sigma, z):
    """Pallas equivalent of IsoGaussianModel.forward(mean, target, n_samples=(S,)).

    mean:   (B, size) f32   (B must be 1, as implied by the torch .view)
    target: (B, J, 3) f32
    sigma:  (size,)   f32   (the nn.Parameter)
    z:      (S, size) f32   (the torch.randn draw, passed in for determinism)
    returns (B,) f32  -- min over samples of mean-per-joint squared error.
    """
    mean = mean.astype(jnp.float32)
    target = target.astype(jnp.float32)
    sigma = sigma.astype(jnp.float32)
    z = z.astype(jnp.float32)

    B, size = mean.shape
    S = z.shape[0]
    assert z.shape == (S, size)
    assert B == 1, "torch .view(S, -1, 3) semantics only hold for batch == 1"
    assert size % 3 == 0

    # Joint-dim broadcast exactly as torch does between target (J) and the
    # reshaped samples (M = size // 3).
    J = target.shape[-2]
    M = size // 3
    (Jb,) = np.broadcast_shapes((J,), (M,))
    K = Jb * 3

    t2 = jnp.broadcast_to(target, (B, Jb, 3)).reshape(B, K)          # (1, K)
    if M != Jb:  # degenerate size==3 case: tile sample columns across joints
        mean2 = jnp.broadcast_to(mean.reshape(B, M, 3), (B, Jb, 3)).reshape(B, K)
        sigma2 = jnp.broadcast_to(sigma.reshape(1, M, 3), (1, Jb, 3)).reshape(1, K)
        z2 = jnp.broadcast_to(z.reshape(S, M, 3), (S, Jb, 3)).reshape(S, K)
    else:
        mean2, sigma2, z2 = mean, sigma.reshape(1, size), z

    ts = _pick_sample_tile(S, K)
    grid = (pl.cdiv(S, ts),)

    out2d = pl.pallas_call(
        functools.partial(_fused_minmpjpe_kernel, inv_j=1.0 / Jb),
        grid=grid,
        in_specs=[
            pl.BlockSpec((1, K), lambda i: (0, 0)),      # mean,   resident
            pl.BlockSpec((1, K), lambda i: (0, 0)),      # sigma,  resident
            pl.BlockSpec((1, K), lambda i: (0, 0)),      # target, resident
            pl.BlockSpec((ts, K), lambda i: (i, 0)),     # z tile, streamed
        ],
        out_specs=pl.BlockSpec((1, 1), lambda i: (0, 0)),
        out_shape=jax.ShapeDtypeStruct((1, 1), jnp.float32),
        scratch_shapes=[pltpu.VMEM((1, 1), jnp.float32)],
        compiler_params=pltpu.CompilerParams(
            dimension_semantics=("arbitrary",)),
    )(mean2, sigma2, t2, z2)
    return out2d[:, 0]


def _reference_forward(mean, target, sigma, z):
    """Pure-jnp transliteration of the PyTorch forward (same z / sigma)."""
    samples = mean[:, None, :] + z[None, :, :] * sigma[None, None, :]
    S = z.shape[0]
    samples_r = samples.reshape(S, -1, 3)
    diff = target[:, None, :, :] - samples_r[None, :, :, :]
    return jnp.min(jnp.mean(jnp.sum(diff * diff, axis=-1), axis=-1), axis=1)


if __name__ == "__main__":
    # IsoGaussianModel(size=48): 16 joints x 3 coords, n_samples=(200,).
    # The forward's `.view(*n_samples, -1, 3)` implies batch == 1 here.
    B, J, S = 1, 16, 200
    size = 3 * J

    key = jax.random.PRNGKey(0)
    k_sigma, k_mean, k_target, k_z = jax.random.split(key, 4)
    sigma = jax.random.uniform(k_sigma, (size,), dtype=jnp.float32)   # ~ torch.rand(size)
    mean = jax.random.normal(k_mean, (B, size), dtype=jnp.float32)
    target = jax.random.normal(k_target, (B, J, 3), dtype=jnp.float32)
    z = jax.random.normal(k_z, (S, size), dtype=jnp.float32)          # ~ torch.randn

    out = jax.block_until_ready(iso_gaussian_forward(mean, target, sigma, z))
    ref = jax.block_until_ready(_reference_forward(mean, target, sigma, z))

    assert out.shape == (B,)
    np.testing.assert_allclose(np.asarray(out), np.asarray(ref), rtol=1e-5, atol=1e-5)
    print("KERNEL_OK")
</pallas_src>

<mosaic_0001>
module attributes {stable_mosaic.version = 11 : i64} {
  func.func @_fused_minmpjpe_kernel(%arg0: i32, %arg1: memref<1x48xf32, #tpu.memory_space<vmem>>, %arg2: memref<1x48xf32, #tpu.memory_space<vmem>>, %arg3: memref<1x48xf32, #tpu.memory_space<vmem>>, %arg4: memref<200x48xf32, #tpu.memory_space<vmem>>, %arg5: memref<1x1xf32, #tpu.memory_space<vmem>>, %arg6: memref<1x1xf32, #tpu.memory_space<vmem>>) attributes {dimension_semantics = [#tpu.dimension_semantics<arbitrary>], iteration_bounds = array<i64: 1>, scalar_prefetch = 0 : i64, scratch_operands = 1 : i64, tpu.core_type = #tpu.core_type<tc>, window_params = [{pipeline_mode = #tpu.pipeline_mode<synchronous>, transform_indices = @transform_0, window_bounds = array<i64: 1, 48>}, {pipeline_mode = #tpu.pipeline_mode<synchronous>, transform_indices = @transform_1, window_bounds = array<i64: 1, 48>}, {pipeline_mode = #tpu.pipeline_mode<synchronous>, transform_indices = @transform_2, window_bounds = array<i64: 1, 48>}, {transform_indices = @transform_3, window_bounds = array<i64: 200, 48>}, {pipeline_mode = #tpu.pipeline_mode<synchronous>, transform_indices = @transform_4, window_bounds = array<i64: 1, 1>}]} {
    %c0_i32 = arith.constant 0 : i32
    %0 = arith.cmpi eq, %arg0, %c0_i32 : i32
    %1 = arith.extui %0 : i1 to i32
    %c0_i32_0 = arith.constant 0 : i32
    %2 = arith.cmpi ne, %1, %c0_i32_0 : i32
    scf.if %2 {
      %cst_15 = arith.constant 0x7F800000 : f32
      %24 = vector.broadcast %cst_15 : f32 to vector<1x1xf32>
      %c0_16 = arith.constant 0 : index
      %c0_17 = arith.constant 0 : index
      %25 = vector.load %arg6[%c0_16, %c0_17] : memref<1x1xf32, #tpu.memory_space<vmem>>, vector<1x1xf32>
      tpu.vector_store %arg6[%c0_16, %c0_17], %24 {strides = array<i32>} : memref<1x1xf32, #tpu.memory_space<vmem>>, vector<1x1xf32>,
    } else {
    }
    %c0 = arith.constant 0 : index
    %c0_1 = arith.constant 0 : index
    %3 = vector.load %arg1[%c0, %c0_1] : memref<1x48xf32, #tpu.memory_space<vmem>>, vector<1x48xf32>
    %c0_2 = arith.constant 0 : index
    %c0_3 = arith.constant 0 : index
    %4 = vector.load %arg4[%c0_2, %c0_3] : memref<200x48xf32, #tpu.memory_space<vmem>>, vector<200x48xf32>
    %c0_4 = arith.constant 0 : index
    %c0_5 = arith.constant 0 : index
    %5 = vector.load %arg2[%c0_4, %c0_5] : memref<1x48xf32, #tpu.memory_space<vmem>>, vector<1x48xf32>
    %6 = vector.broadcast %5 : vector<1x48xf32> to vector<200x48xf32>
    %7 = arith.mulf %4, %6 : vector<200x48xf32>
    %8 = vector.broadcast %3 : vector<1x48xf32> to vector<200x48xf32>
    %9 = arith.addf %8, %7 : vector<200x48xf32>
    %c0_6 = arith.constant 0 : index
    %c0_7 = arith.constant 0 : index
    %10 = vector.load %arg3[%c0_6, %c0_7] : memref<1x48xf32, #tpu.memory_space<vmem>>, vector<1x48xf32>
    %11 = vector.broadcast %10 : vector<1x48xf32> to vector<200x48xf32>
    %12 = arith.subf %11, %9 : vector<200x48xf32>
    %13 = arith.mulf %12, %12 : vector<200x48xf32>
    %cst = arith.constant dense<0.000000e+00> : vector<200xf32>
    %14 = vector.multi_reduction <add>, %13, %cst [1] : vector<200x48xf32> to vector<200xf32>
    %15 = vector.shape_cast %14 : vector<200xf32> to vector<200x1xf32>
    %c0_8 = arith.constant 0 : index
    %c0_9 = arith.constant 0 : index
    %16 = vector.load %arg6[%c0_8, %c0_9] : memref<1x1xf32, #tpu.memory_space<vmem>>, vector<1x1xf32>
    %cst_10 = arith.constant dense<0x7F800000> : vector<1xf32>
    %17 = vector.multi_reduction <minimumf>, %15, %cst_10 [0] : vector<200x1xf32> to vector<1xf32>
    %18 = vector.shape_cast %17 : vector<1xf32> to vector<1x1xf32>
    %19 = arith.minimumf %16, %18 : vector<1x1xf32>
    %c0_11 = arith.constant 0 : index
    %c0_12 = arith.constant 0 : index
    %20 = vector.load %arg6[%c0_11, %c0_12] : memref<1x1xf32, #tpu.memory_space<vmem>>, vector<1x1xf32>
    tpu.vector_store %arg6[%c0_11, %c0_12], %19 {strides = array<i32>} : memref<1x1xf32, #tpu.memory_space<vmem>>, vector<1x1xf32>,
    %c0_i32_13 = arith.constant 0 : i32
    %21 = arith.cmpi eq, %arg0, %c0_i32_13 : i32
    %22 = arith.extui %21 : i1 to i32
    %c0_i32_14 = arith.constant 0 : i32
    %23 = arith.cmpi ne, %22, %c0_i32_14 : i32
    scf.if %23 {
      %c0_15 = arith.constant 0 : index
      %c0_16 = arith.constant 0 : index
      %24 = vector.load %arg6[%c0_15, %c0_16] : memref<1x1xf32, #tpu.memory_space<vmem>>, vector<1x1xf32>
      %cst_17 = arith.constant 6.250000e-02 : f32
      %25 = vector.broadcast %cst_17 : f32 to vector<1x1xf32>
      %26 = arith.mulf %24, %25 : vector<1x1xf32>
      %c0_18 = arith.constant 0 : index
      %c0_19 = arith.constant 0 : index
      %27 = vector.load %arg5[%c0_18, %c0_19] : memref<1x1xf32, #tpu.memory_space<vmem>>, vector<1x1xf32>
      tpu.vector_store %arg5[%c0_18, %c0_19], %26 {strides = array<i32>} : memref<1x1xf32, #tpu.memory_space<vmem>>, vector<1x1xf32>,
    } else {
    }
    return
  }
  func.func @transform_0(%arg0: i32) -> (i32, i32) {
    %c0_i32 = arith.constant 0 : i32
    %c0_i32_0 = arith.constant 0 : i32
    %c0_i32_1 = arith.constant 0 : i32
    return %c0_i32, %c0_i32_0 : i32, i32
  }
  func.func @transform_1(%arg0: i32) -> (i32, i32) {
    %c0_i32 = arith.constant 0 : i32
    %c0_i32_0 = arith.constant 0 : i32
    %c0_i32_1 = arith.constant 0 : i32
    return %c0_i32, %c0_i32_0 : i32, i32
  }
  func.func @transform_2(%arg0: i32) -> (i32, i32) {
    %c0_i32 = arith.constant 0 : i32
    %c0_i32_0 = arith.constant 0 : i32
    %c0_i32_1 = arith.constant 0 : i32
    return %c0_i32, %c0_i32_0 : i32, i32
  }
  func.func @transform_3(%arg0: i32) -> (i32, i32) {
    %c0_i32 = arith.constant 0 : i32
    %c0_i32_0 = arith.constant 0 : i32
    return %arg0, %c0_i32 : i32, i32
  }
  func.func @transform_4(%arg0: i32) -> (i32, i32) {
    %c0_i32 = arith.constant 0 : i32
    %c0_i32_0 = arith.constant 0 : i32
    %c0_i32_1 = arith.constant 0 : i32
    return %c0_i32, %c0_i32_0 : i32, i32
  }
}

</mosaic_0001>

<llo_original>
// kernel: tpu_custom_call.1
$region0: #{tpu_custom_call.1}
  #allocation0 [shape = 'u32[]', space=smem, size = 0x4, offset = 0x4, fixed_abs, tag = 'smem constant byte address 0x4 - core index']
  #allocation1 [shape = 'u32[144,128]{1,0:T(1,128)}', space=vmem, size = 0x12000, scoped, tag = 'internal scratch']
  #allocation2 [shape = 'f32[1,1]{1,0:T(1,128)}', space=vmem, size = 0x200, scoped, tag = 'scratch operand']
  %s0 = inlined_call_operand.vmem [shape: f32[1,48], index: 0, kind: input, shape index: {}]
  %s1 = inlined_call_operand.vmem [shape: f32[1,48], index: 1, kind: input, shape index: {}]
  %s2 = inlined_call_operand.vmem [shape: f32[1,48], index: 2, kind: input, shape index: {}]
  %s3 = inlined_call_operand.vmem [shape: f32[200,48], index: 3, kind: input, shape index: {}]
  %s4 = inlined_call_operand.hbm [shape: f32[1,1], index: 4, kind: output, shape index: {}]
  %s5 = sld [smem:[#allocation0]]
  $region34: #{tpu_custom_call.1} parent=0
    _
  %s7 = ssub.s32 1, %s5
  %s8 = scalar_select 0, %s7, %s5
  $region1: #{tpu_custom_call.1} parent=0
    #allocation3 [shape = 'u8[512]{0}', space=vmem, size = 0x400, scoped, tag = 'output window, operand 0, single buffered']
    #allocation4 [shape = 's32[1]{0}', space=sflag, size = 0x4, scoped, tag = 'scoped memory for tpu_custom_call.1']
    %9 = vsyncpa [#allocation4], 0
    // Predicated region
    $region2: #{tpu_custom_call.1} parent=1 // pred_check
      _
    $region3: #{tpu_custom_call.1} parent=1 // pred_check_branch
      %11 = sbr.rel (0) target = $region5
    $region4: #{tpu_custom_call.1} parent=1 // pred_region
      _
    $region5: #{tpu_custom_call.1} parent=1 // pred_fallthru
      _
    // Predicated region
    $region6: #{tpu_custom_call.1} parent=1 // pred_check
      _
    $region7: #{tpu_custom_call.1} parent=1 // pred_check_branch
      %13 = sbr.rel (0) target = $region9
    $region8: #{tpu_custom_call.1} parent=1 // pred_region
      _
    $region9: #{tpu_custom_call.1} parent=1 // pred_fallthru
      _
    // Predicated region
    $region10: #{tpu_custom_call.1} parent=1 // pred_check
      _
    $region11: #{tpu_custom_call.1} parent=1 // pred_check_branch
      %15 = sbr.rel (0) target = $region13
    $region12: #{tpu_custom_call.1} parent=1 // pred_region
      _
    $region13: #{tpu_custom_call.1} parent=1 // pred_fallthru
      _
    // Predicated region
    $region14: #{tpu_custom_call.1} parent=1 // pred_check
      _
    $region15: #{tpu_custom_call.1} parent=1 // pred_check_branch
      %17 = sbr.rel (0) target = $region17
    $region16: #{tpu_custom_call.1} parent=1 // pred_region
      _
    $region17: #{tpu_custom_call.1} parent=1 // pred_fallthru
      _
    %p18 = scmp.eq.s32.totalorder 0, 0
    // Predicated region
    $region18: #{tpu_custom_call.1} parent=1 // pred_check
      %p19 = pneg %p18
    $region19: #{tpu_custom_call.1} parent=1 // pred_check_branch
      %21 = sbr.rel (%p19) target = $region21
    $region20: #{tpu_custom_call.1} parent=1 // pred_region
      %vm22 = vcmask 0
      %23 = vst.msk [vmem:[#allocation2] sm:$0x1] %vm22, inf
    $region21: #{tpu_custom_call.1} parent=1 // pred_fallthru
      _
    %v24 = vld [vmem:[%s0] sm:$0x1]
    %v25 = vld [vmem:[%s3] sm:$0xff]
    %v26 = vld [vmem:[%s3 + $0x8] sm:$0xff]
    %v27 = vld [vmem:[%s3 + $0x10] sm:$0xff]
    %v28 = vld [vmem:[%s3 + $0x18] sm:$0xff]
    %v29 = vld [vmem:[%s3 + $0x20] sm:$0xff]
    %v30 = vld [vmem:[%s3 + $0x28] sm:$0xff]
    %v31 = vld [vmem:[%s3 + $0x30] sm:$0xff]
    %v32 = vld [vmem:[%s3 + $0x38] sm:$0xff]
    %v33 = vld [vmem:[%s3 + $0x40] sm:$0xff]
    %v34 = vld [vmem:[%s3 + $0x48] sm:$0xff]
    %v35 = vld [vmem:[%s3 + $0x50] sm:$0xff]
    %v36 = vld [vmem:[%s3 + $0x58] sm:$0xff]
    %v37 = vld [vmem:[%s3 + $0x60] sm:$0xff]
    %v38 = vld [vmem:[%s3 + $0x68] sm:$0xff]
    %v39 = vld [vmem:[%s3 + $0x70] sm:$0xff]
    %v40 = vld [vmem:[%s3 + $0x78] sm:$0xff]
    %v41 = vld [vmem:[%s3 + $0x80] sm:$0xff]
    %v42 = vld [vmem:[%s3 + $0x88] sm:$0xff]
    %v43 = vld [vmem:[%s3 + $0x90] sm:$0xff]
    %v44 = vld [vmem:[%s3 + $0x98] sm:$0xff]
    %v45 = vld [vmem:[%s3 + $0xa0] sm:$0xff]
    %v46 = vld [vmem:[%s3 + $0xa8] sm:$0xff]
    %v47 = vld [vmem:[%s3 + $0xb0] sm:$0xff]
    %v48 = vld [vmem:[%s3 + $0xb8] sm:$0xff]
    %v49 = vld [vmem:[%s3 + $0xc0] sm:$0xff]
    %v50 = vld [vmem:[%s1] sm:$0x1]
    %v52 = vlaneseq
    %v53 = vshrl.u32 %v52, 7
    %v54 = vsub.s32 0, %v53
    %v55 = vrot.slane %v50, %v54
    %v57 = vmul.f32 %v25, %v55
    %v58 = vmul.f32 %v26, %v55
    %v59 = vmul.f32 %v27, %v55
    %v60 = vmul.f32 %v28, %v55
    %v61 = vmul.f32 %v29, %v55
    %v62 = vmul.f32 %v30, %v55
    %v63 = vmul.f32 %v31, %v55
    %v64 = vmul.f32 %v32, %v55
    %v65 = vmul.f32 %v33, %v55
    %v66 = vmul.f32 %v34, %v55
    %v67 = vmul.f32 %v35, %v55
    %v68 = vmul.f32 %v36, %v55
    %v69 = vmul.f32 %v37, %v55
    %v70 = vmul.f32 %v38, %v55
    %v71 = vmul.f32 %v39, %v55
    %v72 = vmul.f32 %v40, %v55
    %v73 = vmul.f32 %v41, %v55
    %v74 = vmul.f32 %v42, %v55
    %v75 = vmul.f32 %v43, %v55
    %v76 = vmul.f32 %v44, %v55
    %v77 = vmul.f32 %v45, %v55
    %v78 = vmul.f32 %v46, %v55
    %v79 = vmul.f32 %v47, %v55
    %v80 = vmul.f32 %v48, %v55
    %v81 = vmul.f32 %v49, %v55
    %v83 = vlaneseq
    %v84 = vshrl.u32 %v83, 7
    %v85 = vsub.s32 0, %v84
    %v86 = vrot.slane %v24, %v85
    %v88 = vadd.f32 %v86, %v57
    %v89 = vadd.f32 %v86, %v58
    %v90 = vadd.f32 %v86, %v59
    %v91 = vadd.f32 %v86, %v60
    %v92 = vadd.f32 %v86, %v61
    %v93 = vadd.f32 %v86, %v62
    %v94 = vadd.f32 %v86, %v63
    %v95 = vadd.f32 %v86, %v64
    %v96 = vadd.f32 %v86, %v65
    %v97 = vadd.f32 %v86, %v66
    %v98 = vadd.f32 %v86, %v67
    %v99 = vadd.f32 %v86, %v68
    %v100 = vadd.f32 %v86, %v69
    %v101 = vadd.f32 %v86, %v70
    %v102 = vadd.f32 %v86, %v71
    %v103 = vadd.f32 %v86, %v72
    %v104 = vadd.f32 %v86, %v73
    %v105 = vadd.f32 %v86, %v74
    %v106 = vadd.f32 %v86, %v75
    %v107 = vadd.f32 %v86, %v76
    %v108 = vadd.f32 %v86, %v77
    %v109 = vadd.f32 %v86, %v78
    %v110 = vadd.f32 %v86, %v79
    %v111 = vadd.f32 %v86, %v80
    %v112 = vadd.f32 %v86, %v81
    %v113 = vld [vmem:[%s2] sm:$0x1]
    %v115 = vlaneseq
    %v116 = vshrl.u32 %v115, 7
    %v117 = vsub.s32 0, %v116
    %v118 = vrot.slane %v113, %v117
    %v120 = vsub.f32 %v118, %v88
    %v121 = vsub.f32 %v118, %v89
    %v122 = vsub.f32 %v118, %v90
    %v123 = vsub.f32 %v118, %v91
    %v124 = vsub.f32 %v118, %v92
    %v125 = vsub.f32 %v118, %v93
    %v126 = vsub.f32 %v118, %v94
    %v127 = vsub.f32 %v118, %v95
    %v128 = vsub.f32 %v118, %v96
    %v129 = vsub.f32 %v118, %v97
    %v130 = vsub.f32 %v118, %v98
    %v131 = vsub.f32 %v118, %v99
    %v132 = vsub.f32 %v118, %v100
    %v133 = vsub.f32 %v118, %v101
    %v134 = vsub.f32 %v118, %v102
    %v135 = vsub.f32 %v118, %v103
    %v136 = vsub.f32 %v118, %v104
    %v137 = vsub.f32 %v118, %v105
    %v138 = vsub.f32 %v118, %v106
    %v139 = vsub.f32 %v118, %v107
    %v140 = vsub.f32 %v118, %v108
    %v141 = vsub.f32 %v118, %v109
    %v142 = vsub.f32 %v118, %v110
    %v143 = vsub.f32 %v118, %v111
    %v144 = vsub.f32 %v118, %v112
    %v145 = vmul.f32 %v120, %v120
    %v146 = vmul.f32 %v121, %v121
    %v147 = vmul.f32 %v122, %v122
    %v148 = vmul.f32 %v123, %v123
    %v149 = vmul.f32 %v124, %v124
    %v150 = vmul.f32 %v125, %v125
    %v151 = vmul.f32 %v126, %v126
    %v152 = vmul.f32 %v127, %v127
    %v153 = vmul.f32 %v128, %v128
    %v154 = vmul.f32 %v129, %v129
    %v155 = vmul.f32 %v130, %v130
    %v156 = vmul.f32 %v131, %v131
    %v157 = vmul.f32 %v132, %v132
    %v158 = vmul.f32 %v133, %v133
    %v159 = vmul.f32 %v134, %v134
    %v160 = vmul.f32 %v135, %v135
    %v161 = vmul.f32 %v136, %v136
    %v162 = vmul.f32 %v137, %v137
    %v163 = vmul.f32 %v138, %v138
    %v164 = vmul.f32 %v139, %v139
    %v165 = vmul.f32 %v140, %v140
    %v166 = vmul.f32 %v141, %v141
    %v167 = vmul.f32 %v142, %v142
    %v168 = vmul.f32 %v143, %v143
    %v169 = vmul.f32 %v144, %v144
    %vm170 = vcmask 392192
    %v171 = vsel %vm170, %v145, 0.0
    %172 = vadd.xlane.f32.xlu0 %v171
    %v173 = vpop.xlane.xlu0 %172
    %v174 = vsel %vm170, %v146, 0.0
    %175 = vadd.xlane.f32.xlu0 %v174
    %v176 = vpop.xlane.xlu0 %175
    %v177 = vsel %vm170, %v147, 0.0
    %178 = vadd.xlane.f32.xlu0 %v177
    %v179 = vpop.xlane.xlu0 %178
    %v180 = vsel %vm170, %v148, 0.0
    %181 = vadd.xlane.f32.xlu0 %v180
    %v182 = vpop.xlane.xlu0 %181
    %v183 = vsel %vm170, %v149, 0.0
    %184 = vadd.xlane.f32.xlu0 %v183
    %v185 = vpop.xlane.xlu0 %184
    %v186 = vsel %vm170, %v150, 0.0
    %187 = vadd.xlane.f32.xlu0 %v186
    %v188 = vpop.xlane.xlu0 %187
    %v189 = vsel %vm170, %v151, 0.0
    %190 = vadd.xlane.f32.xlu0 %v189
    %v191 = vpop.xlane.xlu0 %190
    %v192 = vsel %vm170, %v152, 0.0
    %193 = vadd.xlane.f32.xlu0 %v192
    %v194 = vpop.xlane.xlu0 %193
    %v195 = vsel %vm170, %v153, 0.0
    %196 = vadd.xlane.f32.xlu0 %v195
    %v197 = vpop.xlane.xlu0 %196
    %v198 = vsel %vm170, %v154, 0.0
    %199 = vadd.xlane.f32.xlu0 %v198
    %v200 = vpop.xlane.xlu0 %199
    %v201 = vsel %vm170, %v155, 0.0
    %202 = vadd.xlane.f32.xlu0 %v201
    %v203 = vpop.xlane.xlu0 %202
    %v204 = vsel %vm170, %v156, 0.0
    %205 = vadd.xlane.f32.xlu0 %v204
    %v206 = vpop.xlane.xlu0 %205
    %v207 = vsel %vm170, %v157, 0.0
    %208 = vadd.xlane.f32.xlu0 %v207
    %v209 = vpop.xlane.xlu0 %208
    %v210 = vsel %vm170, %v158, 0.0
    %211 = vadd.xlane.f32.xlu0 %v210
    %v212 = vpop.xlane.xlu0 %211
    %v213 = vsel %vm170, %v159, 0.0
    %214 = vadd.xlane.f32.xlu0 %v213
    %v215 = vpop.xlane.xlu0 %214
    %v216 = vsel %vm170, %v160, 0.0
    %217 = vadd.xlane.f32.xlu0 %v216
    %v218 = vpop.xlane.xlu0 %217
    %v219 = vsel %vm170, %v161, 0.0
    %220 = vadd.xlane.f32.xlu0 %v219
    %v221 = vpop.xlane.xlu0 %220
    %v222 = vsel %vm170, %v162, 0.0
    %223 = vadd.xlane.f32.xlu0 %v222
    %v224 = vpop.xlane.xlu0 %223
    %v225 = vsel %vm170, %v163, 0.0
    %226 = vadd.xlane.f32.xlu0 %v225
    %v227 = vpop.xlane.xlu0 %226
    %v228 = vsel %vm170, %v164, 0.0
    %229 = vadd.xlane.f32.xlu0 %v228
    %v230 = vpop.xlane.xlu0 %229
    %v231 = vsel %vm170, %v165, 0.0
    %232 = vadd.xlane.f32.xlu0 %v231
    %v233 = vpop.xlane.xlu0 %232
    %v234 = vsel %vm170, %v166, 0.0
    %235 = vadd.xlane.f32.xlu0 %v234
    %v236 = vpop.xlane.xlu0 %235
    %v237 = vsel %vm170, %v167, 0.0
    %238 = vadd.xlane.f32.xlu0 %v237
    %v239 = vpop.xlane.xlu0 %238
    %v240 = vsel %vm170, %v168, 0.0
    %241 = vadd.xlane.f32.xlu0 %v240
    %v242 = vpop.xlane.xlu0 %241
    %v243 = vsel %vm170, %v169, 0.0
    %244 = vadd.xlane.f32.xlu0 %v243
    %v245 = vpop.xlane.xlu0 %244
    %v246 = vld [vmem:[#allocation2] sm:$0x1]
    %v247 = vmin.f32 %v173, %v185
    %v248 = vmin.f32 %v176, %v188
    %v249 = vmin.f32 %v179, %v191
    %v250 = vmin.f32 %v182, %v194
    %v251 = vmin.f32 %v247, %v197
    %v252 = vmin.f32 %v248, %v200
    %v253 = vmin.f32 %v249, %v203
    %v254 = vmin.f32 %v250, %v206
    %v255 = vmin.f32 %v251, %v209
    %v256 = vmin.f32 %v252, %v212
    %v257 = vmin.f32 %v253, %v215
    %v258 = vmin.f32 %v254, %v218
    %v259 = vmin.f32 %v255, %v221
    %v260 = vmin.f32 %v256, %v224
    %v261 = vmin.f32 %v257, %v227
    %v262 = vmin.f32 %v258, %v230
    %v263 = vmin.f32 %v259, %v233
    %v264 = vmin.f32 %v260, %v236
    %v265 = vmin.f32 %v261, %v239
    %v266 = vmin.f32 %v262, %v242
    %v267 = vmin.f32 %v263, %v245
    %v268 = vmin.f32 %v267, %v264
    %v269 = vmin.f32 %v265, %v266
    %v270 = vmin.f32 %v268, %v269
    %v271 = vrot.slane %v270, 4
    %v272 = vmin.f32 %v270, %v271
    %v273 = vrot.slane %v272, 2
    %v274 = vmin.f32 %v272, %v273
    %v275 = vrot.slane %v274, 1
    %v276 = vmin.f32 %v274, %v275
    %v277 = vmin.f32 %v246, %v276
    %vm278 = vcmask 0
    %279 = vst.msk [vmem:[#allocation2] sm:$0x1] %vm278, %v277
    // Predicated region
    $region22: #{tpu_custom_call.1} parent=1 // pred_check
      %p280 = pneg %p18
    $region23: #{tpu_custom_call.1} parent=1 // pred_check_branch
      %282 = sbr.rel (%p280) target = $region25
    $region24: #{tpu_custom_call.1} parent=1 // pred_region
      %v283 = vld [vmem:[#allocation2] sm:$0x1]
      %v284 = vmul.f32 %v283, 0.0625
      %285 = vst.msk [vmem:[#allocation3] sm:$0x1] %vm278, %v284
    $region25: #{tpu_custom_call.1} parent=1 // pred_fallthru
      _
    // Predicated region
    $region26: #{tpu_custom_call.1} parent=1 // pred_check
      _
    $region27: #{tpu_custom_call.1} parent=1 // pred_check_branch
      %287 = sbr.rel (0) target = $region29
    $region28: #{tpu_custom_call.1} parent=1 // pred_region
      %s289 = ssub.s32 16, 16
      %290 = vsyncadd [#allocation4], %s289
      %s292 = sshll.u32 [#allocation3], 4
      %s293 = int_to_ptr.vmem [resolvable:$true] %s292
      %295 = dma.vmem_to_hbm [thread:$0]  %s293, 16, %s4, [#allocation4]
    $region29: #{tpu_custom_call.1} parent=1 // pred_fallthru
      _
    // Predicated region
    $region30: #{tpu_custom_call.1} parent=1 // pred_check
      _
    $region31: #{tpu_custom_call.1} parent=1 // pred_check_branch
      %297 = sbr.rel (0) target = $region33
    $region32: #{tpu_custom_call.1} parent=1 // pred_region
      %298 = dma.done [#allocation4], 16
    $region33: #{tpu_custom_call.1} parent=1 // pred_fallthru
      _
    %299 = vsyncpa [#allocation4], 1

</llo_original>
